<compile_context>
chip_gen: v7x
topology: tpu7x:2x2x1
jax: 0.10.0
libtpu: 0.0.40
codegen_flags: <defaults>
</compile_context>

<pallas_src>
import functools

import jax
import jax.numpy as jnp
from jax import lax
from jax.experimental import pallas as pl
from jax.experimental.pallas import tpu as pltpu


def _logistic_propensity_kernel(x_ref, w_ref, b_ref, o_ref, *, apply_sigmoid):
    # x_ref: (TB, D) VMEM (streamed over the batch grid axis)
    # w_ref: (1, D)  VMEM (resident across the grid)
    # b_ref: (1,)    SMEM scalar
    # o_ref: (1, 1, TB) VMEM (lane-dense per-tile output row)
    x = x_ref[...]                       # (TB, D)
    w = w_ref[...]                       # (1, D)
    # Contract feature dims of w and x: (1, D) . (TB, D) -> (1, TB).
    # Same pattern as q @ k.T — no explicit transpose/relayout of the x tile,
    # and the result is already lane-dense.
    eta = lax.dot_general(
        w, x, (((1,), (1,)), ((), ())), preferred_element_type=jnp.float32)
    eta = eta + b_ref[0]                 # scalar bias from SMEM
    if apply_sigmoid:
        eta = jax.nn.sigmoid(eta)
    o_ref[...] = eta.reshape(o_ref.shape).astype(o_ref.dtype)


def _choose_batch_tile(batch, feat):
    """Largest batch tile (multiple of 8, <=2048) whose double-buffered
    (TB, D) f32 tile stays within a ~24 MiB budget (safe on v7x's 64 MiB VMEM
    and under the 48 MiB scoped limit requested below)."""
    b_pad8 = ((batch + 7) // 8) * 8
    budget_bytes = 24 * 1024 * 1024
    tb = budget_bytes // (2 * feat * 4)
    tb = max(8, min(tb, 2048, b_pad8))
    return max(8, (tb // 8) * 8)


def logistic_propensity_forward(x, weight, bias, sigmoid=False):
    """Pallas implementation of LogisticPropensityEstimator.forward.

    x:      (B, D) float
    weight: (1, D) float   (nn.Linear(input_dim, 1).weight)
    bias:   (1,)   float   (nn.Linear(input_dim, 1).bias)
    returns (B, 1) float32 (sigmoid applied iff sigmoid=True)
    """
    B, D = x.shape
    x = x.astype(jnp.float32)
    weight = weight.reshape(1, D).astype(jnp.float32)
    bias = bias.reshape(1).astype(jnp.float32)

    tb = _choose_batch_tile(B, D)
    num_tiles = pl.cdiv(B, tb)
    b_pad = num_tiles * tb
    if b_pad != B:
        # Zero-pad the batch to a whole number of tiles; padded rows are
        # sliced off below.
        x = jnp.pad(x, ((0, b_pad - B), (0, 0)))

    kernel = functools.partial(_logistic_propensity_kernel,
                               apply_sigmoid=bool(sigmoid))

    out = pl.pallas_call(
        kernel,
        out_shape=jax.ShapeDtypeStruct((num_tiles, 1, tb), jnp.float32),
        grid=(num_tiles,),
        in_specs=[
            # x: one (TB, D) batch tile per grid step (pipelined/double-buffered).
            pl.BlockSpec((tb, D), lambda i: (i, 0)),
            # weight: same block every step -> stays resident in VMEM.
            pl.BlockSpec((1, D), lambda i: (0, 0)),
            # bias: scalar in SMEM (no padded VMEM tile / vector load).
            pl.BlockSpec(memory_space=pltpu.MemorySpace.SMEM),
        ],
        # Lane-dense output slab: one (1, 1, TB) row per tile.
        out_specs=pl.BlockSpec((1, 1, tb), lambda i: (i, 0, 0)),
        compiler_params=pltpu.CompilerParams(
            # Independent batch tiles -> shard across TCs on v7x megacore.
            dimension_semantics=("parallel",),
            # Raise the scoped VMEM limit (v5e default is only 16 MiB) while
            # staying under v7x's 64 MiB physical VMEM.
            vmem_limit_bytes=48 * 1024 * 1024,
        ),
    )(x, weight, bias)

    # (num_tiles, 1, TB) -> (B, 1), dropping padded rows.
    return out.reshape(b_pad)[:B].reshape(B, 1)


if __name__ == "__main__":
    key = jax.random.PRNGKey(0)
    B, D = 8, 32  # batch=8, input_dim=32
    kx, kw, kb = jax.random.split(key, 3)

    x = jax.random.normal(kx, (B, D), dtype=jnp.float32)

    # Parameters exactly as in the module's __init__ (zero-initialized).
    weight0 = jnp.zeros((1, D), dtype=jnp.float32)
    bias0 = jnp.zeros((1,), dtype=jnp.float32)

    eta = jax.block_until_ready(
        logistic_propensity_forward(x, weight0, bias0, sigmoid=False))
    eta_sig = jax.block_until_ready(
        logistic_propensity_forward(x, weight0, bias0, sigmoid=True))
    assert eta.shape == (B, 1) and eta_sig.shape == (B, 1)
    assert jnp.allclose(eta, 0.0, atol=1e-6)          # zeros -> eta == 0
    assert jnp.allclose(eta_sig, 0.5, atol=1e-6)      # sigmoid(0) == 0.5

    # Also validate the math with nonzero parameters (e.g. post-training).
    weight = jax.random.normal(kw, (1, D), dtype=jnp.float32)
    bias = jax.random.normal(kb, (1,), dtype=jnp.float32)
    got = jax.block_until_ready(
        logistic_propensity_forward(x, weight, bias, sigmoid=True))
    ref = jax.nn.sigmoid(x @ weight.T + bias.reshape(1, 1))
    assert jnp.allclose(got, ref, atol=1e-5, rtol=1e-5)

    got_lin = jax.block_until_ready(
        logistic_propensity_forward(x, weight, bias, sigmoid=False))
    ref_lin = x @ weight.T + bias.reshape(1, 1)
    assert jnp.allclose(got_lin, ref_lin, atol=1e-5, rtol=1e-5)

    print("KERNEL_OK")
</pallas_src>

<mosaic_0001>
module attributes {stable_mosaic.version = 11 : i64} {
  func.func @_logistic_propensity_kernel(%arg0: i32, %arg1: memref<8x32xf32, #tpu.memory_space<vmem>>, %arg2: memref<1x32xf32, #tpu.memory_space<vmem>>, %arg3: memref<1xf32, #tpu.memory_space<smem>>, %arg4: memref<1x1x8xf32, #tpu.memory_space<vmem>>) attributes {dimension_semantics = [#tpu.dimension_semantics<parallel>], iteration_bounds = array<i64: 1>, scalar_prefetch = 0 : i64, scratch_operands = 0 : i64, tpu.core_type = #tpu.core_type<tc>, window_params = [{transform_indices = @transform_0, window_bounds = array<i64: 8, 32>}, {pipeline_mode = #tpu.pipeline_mode<synchronous>, transform_indices = @transform_1, window_bounds = array<i64: 1, 32>}, {transform_indices = @transform_2, window_bounds = array<i64: 1>}, {transform_indices = @transform_3, window_bounds = array<i64: 1, 1, 8>}]} {
    %c0 = arith.constant 0 : index
    %c0_0 = arith.constant 0 : index
    %0 = vector.load %arg1[%c0, %c0_0] : memref<8x32xf32, #tpu.memory_space<vmem>>, vector<8x32xf32>
    %c0_1 = arith.constant 0 : index
    %c0_2 = arith.constant 0 : index
    %1 = vector.load %arg2[%c0_1, %c0_2] : memref<1x32xf32, #tpu.memory_space<vmem>>, vector<1x32xf32>
    %cst = arith.constant dense<0.000000e+00> : vector<1x8xf32>
    %2 = tpu.matmul %1, %0, %cst {dimension_numbers = #tpu.dot_dimension_numbers<[1], [1], [0], [0], [0, 0, 1, 0], [], []>} : vector<1x32xf32>, vector<8x32xf32>, vector<1x8xf32> -> vector<1x8xf32>
    %c0_3 = arith.constant 0 : index
    %3 = memref.load %arg3[%c0_3] : memref<1xf32, #tpu.memory_space<smem>>
    %4 = vector.broadcast %3 : f32 to vector<1x8xf32>
    %5 = arith.addf %2, %4 : vector<1x8xf32>
    %6 = vector.shape_cast %5 : vector<1x8xf32> to vector<1x1x8xf32>
    %c0_4 = arith.constant 0 : index
    %c0_5 = arith.constant 0 : index
    %c0_6 = arith.constant 0 : index
    %7 = vector.load %arg4[%c0_4, %c0_5, %c0_6] : memref<1x1x8xf32, #tpu.memory_space<vmem>>, vector<1x1x8xf32>
    tpu.vector_store %arg4[%c0_4, %c0_5, %c0_6], %6 {strides = array<i32>} : memref<1x1x8xf32, #tpu.memory_space<vmem>>, vector<1x1x8xf32>,
    return
  }
  func.func @transform_0(%arg0: i32) -> (i32, i32) {
    %c0_i32 = arith.constant 0 : i32
    %c0_i32_0 = arith.constant 0 : i32
    return %arg0, %c0_i32 : i32, i32
  }
  func.func @transform_1(%arg0: i32) -> (i32, i32) {
    %c0_i32 = arith.constant 0 : i32
    %c0_i32_0 = arith.constant 0 : i32
    %c0_i32_1 = arith.constant 0 : i32
    return %c0_i32, %c0_i32_0 : i32, i32
  }
  func.func @transform_2(%arg0: i32) -> i32 {
    %c0_i32 = arith.constant 0 : i32
    %c0_i32_0 = arith.constant 0 : i32
    return %c0_i32 : i32
  }
  func.func @transform_3(%arg0: i32) -> (i32, i32, i32) {
    %c0_i32 = arith.constant 0 : i32
    %c0_i32_0 = arith.constant 0 : i32
    %c0_i32_1 = arith.constant 0 : i32
    return %arg0, %c0_i32, %c0_i32_0 : i32, i32, i32
  }
}

</mosaic_0001>

<llo_original>
// kernel: tpu_custom_call.1
$region0: #{tpu_custom_call.1}
  #allocation0 [shape = 'u32[]', space=smem, size = 0x4, offset = 0x4, fixed_abs, tag = 'smem constant byte address 0x4 - core index']
  #allocation1 [shape = 'u32[144,128]{1,0:T(1,128)}', space=vmem, size = 0x12000, scoped, tag = 'internal scratch']
  #allocation2 [shape = 'f32[1]{0:T(128)S(6)}', space=smem, size = 0x200, scoped, tag = 'scoped memory for tpu_custom_call.1']
  %s0 = inlined_call_operand.hbm [shape: f32[8,32], index: 0, kind: input, shape index: {}]
  %s1 = inlined_call_operand.vmem [shape: f32[1,32], index: 1, kind: input, shape index: {}]
  %s2 = inlined_call_operand.<no memory space> [shape: f32[1], index: 2, kind: input, shape index: {}]
  %s3 = inlined_call_operand.hbm [shape: f32[1,1,8], index: 3, kind: output, shape index: {}]
  %s4 = sld [smem:[#allocation0]]
  $region26: #{tpu_custom_call.1} parent=0
    _
  %s6 = ssub.s32 1, %s4
  %s7 = scalar_select 0, %s6, %s4
  %8 = sst [smem:[#allocation2]] %s2
  $region1: #{tpu_custom_call.1} parent=0
    #allocation3 [shape = 'u8[4096]{0}', space=vmem, size = 0x1000, scoped, tag = 'input window, operand 0, single buffered']
    #allocation4 [shape = 's32[1]{0}', space=sflag, size = 0x4, scoped, tag = 'scoped memory for tpu_custom_call.1']
    #allocation5 [shape = 's32[1]{0}', space=sflag, size = 0x4, scoped, tag = 'scoped memory for tpu_custom_call.1']
    #allocation6 [shape = 'u8[512]{0}', space=vmem, size = 0x400, scoped, tag = 'output window, operand 0, single buffered']
    %9 = vsyncpa [#allocation4], 0
    %10 = vsyncpa [#allocation5], 0
    // Predicated region
    $region2: #{tpu_custom_call.1} parent=1 // pred_check
      _
    $region3: #{tpu_custom_call.1} parent=1 // pred_check_branch
      %12 = sbr.rel (0) target = $region5
    $region4: #{tpu_custom_call.1} parent=1 // pred_region
      %s14 = ssub.s32 128, 128
      %15 = vsyncadd [#allocation4], %s14
      %s17 = sshll.u32 [#allocation3], 4
      %s18 = int_to_ptr.vmem [resolvable:$true] %s17
      %20 = dma.hbm_to_vmem [thread:$0]  %s0, 128, %s18, [#allocation4]
    $region5: #{tpu_custom_call.1} parent=1 // pred_fallthru
      _
    // Predicated region
    $region6: #{tpu_custom_call.1} parent=1 // pred_check
      _
    $region7: #{tpu_custom_call.1} parent=1 // pred_check_branch
      %22 = sbr.rel (0) target = $region9
    $region8: #{tpu_custom_call.1} parent=1 // pred_region
      _
    $region9: #{tpu_custom_call.1} parent=1 // pred_fallthru
      _
    // Predicated region
    $region10: #{tpu_custom_call.1} parent=1 // pred_check
      _
    $region11: #{tpu_custom_call.1} parent=1 // pred_check_branch
      %24 = sbr.rel (0) target = $region13
    $region12: #{tpu_custom_call.1} parent=1 // pred_region
      _
    $region13: #{tpu_custom_call.1} parent=1 // pred_fallthru
      _
    // Predicated region
    $region14: #{tpu_custom_call.1} parent=1 // pred_check
      _
    $region15: #{tpu_custom_call.1} parent=1 // pred_check_branch
      %26 = sbr.rel (0) target = $region17
    $region16: #{tpu_custom_call.1} parent=1 // pred_region
      %27 = dma.done [#allocation4], 128
    $region17: #{tpu_custom_call.1} parent=1 // pred_fallthru
      _
    %v28 = vld [vmem:[#allocation3] sm:$0xff]
    %v29 = vld [vmem:[%s1] sm:$0x1]
    %s30 = sld [smem:[#allocation2]]
    %v31 = vstv %s30
    %vm32 = vcmask 261120
    %v34 = vsel %vm32, %v29, 0
    %v37 = vsel %vm32, %v28, 0
    %39 = vmatprep.subr.mxu0 0.0
    %40 = vmatpush1.xpose.msra.mxu0 %v37
    %41 = vmatprep.subr.mxu0 0.0
    %42 = vmatpush1.xpose.msra.mxu0 0.0
    %43 = vmatprep.subr.mxu0 0.0
    %44 = vmatpush1.xpose.msra.mxu0 0.0
    %45 = vmatprep.subr.mxu0 0.0
    %46 = vmatpush1.xpose.msra.mxu0 0.0
    %47 = vmatprep.subr.mxu0 0.0
    %48 = vmatpush1.xpose.msra.mxu0 0.0
    %49 = vmatprep.subr.mxu0 0.0
    %50 = vmatpush1.xpose.msra.mxu0 0.0
    %51 = vmatprep.subr.mxu0 0.0
    %52 = vmatpush1.xpose.msra.mxu0 0.0
    %53 = vmatprep.subr.mxu0 0.0
    %54 = vmatpush1.xpose.msra.mxu0 0.0
    %55 = vmatprep.subr.mxu0 0.0
    %56 = vmatpush1.xpose.msra.mxu0 0.0
    %57 = vmatprep.subr.mxu0 0.0
    %58 = vmatpush1.xpose.msra.mxu0 0.0
    %59 = vmatprep.subr.mxu0 0.0
    %60 = vmatpush1.xpose.msra.mxu0 0.0
    %61 = vmatprep.subr.mxu0 0.0
    %62 = vmatpush1.xpose.msra.mxu0 0.0
    %63 = vmatprep.subr.mxu0 0.0
    %64 = vmatpush1.xpose.msra.mxu0 0.0
    %65 = vmatprep.subr.mxu0 0.0
    %66 = vmatpush1.xpose.msra.mxu0 0.0
    %67 = vmatprep.subr.mxu0 0.0
    %68 = vmatpush1.xpose.msra.mxu0 0.0
    %69 = vmatprep.subr.mxu0 0.0
    %70 = vmatpush1.xpose.msra.mxu0 0.0
    %71 = vmatprep.subr.mxu0 0.0
    %72 = vmatpush1.xpose.msra.mxu0 0.0
    %73 = vmatprep.subr.mxu0 0.0
    %74 = vmatpush1.xpose.msra.mxu0 0.0
    %75 = vmatprep.subr.mxu0 0.0
    %76 = vmatpush1.xpose.msra.mxu0 0.0
    %77 = vmatprep.subr.mxu0 0.0
    %78 = vmatpush1.xpose.msra.mxu0 0.0
    %79 = vmatprep.subr.mxu0 0.0
    %80 = vmatpush1.xpose.msra.mxu0 0.0
    %81 = vmatprep.subr.mxu0 0.0
    %82 = vmatpush1.xpose.msra.mxu0 0.0
    %83 = vmatprep.subr.mxu0 0.0
    %84 = vmatpush1.xpose.msra.mxu0 0.0
    %85 = vmatprep.subr.mxu0 0.0
    %86 = vmatpush1.xpose.msra.mxu0 0.0
    %87 = vmatprep.subr.mxu0 0.0
    %88 = vmatpush1.xpose.msra.mxu0 0.0
    %89 = vmatprep.subr.mxu0 0.0
    %90 = vmatpush1.xpose.msra.mxu0 0.0
    %91 = vmatprep.subr.mxu0 0.0
    %92 = vmatpush1.xpose.msra.mxu0 0.0
    %93 = vmatprep.subr.mxu0 0.0
    %94 = vmatpush1.xpose.msra.mxu0 0.0
    %95 = vmatprep.subr.mxu0 0.0
    %96 = vmatpush1.xpose.msra.mxu0 0.0
    %97 = vmatprep.subr.mxu0 0.0
    %98 = vmatpush1.xpose.msra.mxu0 0.0
    %99 = vmatprep.subr.mxu0 0.0
    %100 = vmatpush1.xpose.msra.mxu0 0.0
    %101 = vmatprep.subr.mxu0 0.0
    %102 = vmatpush1.xpose.msra.mxu0 0.0
    %103 = vmatprep.mubr.f32.mxu0 0.0
    %104 = vmatmul.mubr.f32.gmra.mrb[0].mxu0 %v34
    %v105 = vpop.f32.mrb[0].mxu0
    %v106 = vadd.f32 %v31, %v105
    %v107 = vpop.f32.mrb[0].mxu0
    %108 = vdwg.mxu0
    %vm109 = vcmask 57344
    %110 = vst.msk [vmem:[#allocation6] sm:$0x1] %vm109, %v106
    // Predicated region
    $region18: #{tpu_custom_call.1} parent=1 // pred_check
      _
    $region19: #{tpu_custom_call.1} parent=1 // pred_check_branch
      %112 = sbr.rel (0) target = $region21
    $region20: #{tpu_custom_call.1} parent=1 // pred_region
      %s114 = ssub.s32 16, 16
      %115 = vsyncadd [#allocation5], %s114
      %s117 = sshll.u32 [#allocation6], 4
      %s118 = int_to_ptr.vmem [resolvable:$true] %s117
      %120 = dma.vmem_to_hbm [thread:$0]  %s118, 16, %s3, [#allocation5]
    $region21: #{tpu_custom_call.1} parent=1 // pred_fallthru
      _
    // Predicated region
    $region22: #{tpu_custom_call.1} parent=1 // pred_check
      _
    $region23: #{tpu_custom_call.1} parent=1 // pred_check_branch
      %122 = sbr.rel (0) target = $region25
    $region24: #{tpu_custom_call.1} parent=1 // pred_region
      %123 = dma.done [#allocation5], 16
    $region25: #{tpu_custom_call.1} parent=1 // pred_fallthru
      _
    %124 = vsyncpa [#allocation4], 1
    %125 = vsyncpa [#allocation5], 1

</llo_original>
